<compile_context>
chip_gen: v7x
topology: tpu7x:2x2x1
jax: 0.10.0
libtpu: 0.0.40
codegen_flags: <defaults>
</compile_context>

<pallas_src>
import functools

import jax
import jax.numpy as jnp
from jax.experimental import pallas as pl
from jax.experimental.pallas import tpu as pltpu

K_IN = 28 * 28    # 784 contraction dim (full-dim block, no padding)
H = 128           # hidden width
N_OUT = 10        # logits
N_PAD = 128       # lane-dense padded output width


def _round_up(x, m):
    return (x + m - 1) // m * m


def _net_kernel(x_ref, w1_ref, b1_ref, w2_ref, b2_ref, o_ref):
    # x streamed from HBM as f32; cast to bf16 in VMEM (VPU) just before the MXU.
    x_bf = x_ref[...].astype(jnp.bfloat16)
    h = jnp.dot(x_bf, w1_ref[...], preferred_element_type=jnp.float32)
    h = jnp.maximum(h + b1_ref[...], 0.0)     # bias + ReLU in f32
    # TODO(synk): Dropout(0.2) is identity in eval mode; training-mode masking
    # (pltpu.prng_random_bits) intentionally not applied.
    out = jnp.dot(h.astype(jnp.bfloat16), w2_ref[...],
                  preferred_element_type=jnp.float32)
    o_ref[...] = (out + b2_ref[...]).astype(o_ref.dtype)


@functools.partial(jax.jit, static_argnames=("tb",))
def _net_forward_padded(x2d, w1_bf, b1, w2_pad, b2_pad, *, tb):
    """x2d: (Bp, 784) f32 -> (Bp, 128) f32 padded logits."""
    Bp = x2d.shape[0]
    grid = (Bp // tb,)
    return pl.pallas_call(
        _net_kernel,
        out_shape=jax.ShapeDtypeStruct((Bp, N_PAD), jnp.float32),
        grid_spec=pltpu.PrefetchScalarGridSpec(
            num_scalar_prefetch=0,
            grid=grid,
            in_specs=[
                pl.BlockSpec((tb, K_IN), lambda i: (i, 0)),     # x tile (streamed, f32)
                pl.BlockSpec((K_IN, H), lambda i: (0, 0)),      # W1 bf16 (resident)
                pl.BlockSpec((1, H), lambda i: (0, 0)),         # b1 f32 (resident)
                pl.BlockSpec((H, N_PAD), lambda i: (0, 0)),     # W2 padded bf16 (resident)
                pl.BlockSpec((1, N_PAD), lambda i: (0, 0)),     # b2 padded f32 (resident)
            ],
            out_specs=pl.BlockSpec((tb, N_PAD), lambda i: (i, 0)),
        ),
        compiler_params=pltpu.CompilerParams(
            dimension_semantics=("parallel",),   # megacore sharding on v7x
            vmem_limit_bytes=32 << 20,           # headroom on every gen (v7x has 64 MiB total)
        ),
    )(x2d, w1_bf, b1, w2_pad, b2_pad)


def net_forward(x_nchw, w1, b1, w2, b2, *, tb=2048):
    """x_nchw: (B, 1, 28, 28) float32 -> logits (B, 10) float32.

    w1: (784,128), b1: (1,128), w2: (128,10), b2: (1,10) -- torch Linear layout
    already transposed to (in, out).
    """
    B = x_nchw.shape[0]
    x2d = x_nchw.reshape(B, K_IN)             # torch.nn.Flatten equivalent

    # Batch tile: at most `tb`, at least sublane-aligned (8 rows of f32).
    tb_eff = min(tb, _round_up(B, 8))
    Bp = _round_up(B, tb_eff)
    if Bp != B:
        # Single fused pad pass; only taken when B isn't a multiple of the tile.
        x2d = jnp.pad(x2d, ((0, Bp - B), (0, 0)))

    # One-time tiny weight prep (would normally be hoisted out of the hot path).
    w1_bf = w1.astype(jnp.bfloat16)
    b1_f = b1.reshape(1, H).astype(jnp.float32)

    w2_pad = jnp.zeros((H, N_PAD), jnp.bfloat16)
    w2_pad = w2_pad.at[:, :N_OUT].set(w2.astype(jnp.bfloat16))
    b2_pad = jnp.zeros((1, N_PAD), jnp.float32)
    b2_pad = b2_pad.at[:, :N_OUT].set(b2.reshape(1, N_OUT).astype(jnp.float32))

    out_pad = _net_forward_padded(x2d, w1_bf, b1_f, w2_pad, b2_pad, tb=tb_eff)
    return out_pad[:B, :N_OUT]


def init_params(key):
    """Deterministic init mimicking torch.nn.Linear defaults (U(-1/sqrt(fan_in), +))."""
    k1, k2, k3, k4 = jax.random.split(key, 4)
    fan1 = K_IN
    bound1 = 1.0 / jnp.sqrt(fan1)
    w1 = jax.random.uniform(k1, (fan1, H), jnp.float32, -bound1, bound1)
    b1 = jax.random.uniform(k2, (1, H), jnp.float32, -bound1, bound1)
    fan2 = H
    bound2 = 1.0 / jnp.sqrt(fan2)
    w2 = jax.random.uniform(k3, (fan2, N_OUT), jnp.float32, -bound2, bound2)
    b2 = jax.random.uniform(k4, (1, N_OUT), jnp.float32, -bound2, bound2)
    return w1, b1, w2, b2


if __name__ == "__main__":
    key = jax.random.PRNGKey(0)
    kx, kp = jax.random.split(key)

    B = 32  # small batch; kernel handles arbitrary B via a single jnp.pad if needed
    x = jax.random.normal(kx, (B, 1, 28, 28), jnp.float32)   # NCHW like MNIST
    w1, b1, w2, b2 = init_params(kp)

    logits = net_forward(x, w1, b1, w2, b2)
    jax.block_until_ready(logits)

    # Sanity check against plain-JAX f32 reference (tolerance loosened for
    # bf16 weight/activation streaming; accumulation is f32).
    ref = jnp.maximum(x.reshape(B, -1) @ w1 + b1, 0.0) @ w2 + b2
    assert logits.shape == (B, 10)
    assert jnp.allclose(logits, ref, atol=5e-2, rtol=5e-2), (
        float(jnp.max(jnp.abs(logits - ref))))

    print("KERNEL_OK")
</pallas_src>

<mosaic_0001>
module attributes {stable_mosaic.version = 11 : i64} {
  func.func @_net_kernel(%arg0: i32, %arg1: memref<32x784xf32, #tpu.memory_space<vmem>>, %arg2: memref<784x128xbf16, #tpu.memory_space<vmem>>, %arg3: memref<1x128xf32, #tpu.memory_space<vmem>>, %arg4: memref<128x128xbf16, #tpu.memory_space<vmem>>, %arg5: memref<1x128xf32, #tpu.memory_space<vmem>>, %arg6: memref<32x128xf32, #tpu.memory_space<vmem>>) attributes {dimension_semantics = [#tpu.dimension_semantics<parallel>], iteration_bounds = array<i64: 1>, scalar_prefetch = 0 : i64, scratch_operands = 0 : i64, tpu.core_type = #tpu.core_type<tc>, window_params = [{transform_indices = @transform_0, window_bounds = array<i64: 32, 784>}, {pipeline_mode = #tpu.pipeline_mode<synchronous>, transform_indices = @transform_1, window_bounds = array<i64: 784, 128>}, {pipeline_mode = #tpu.pipeline_mode<synchronous>, transform_indices = @transform_2, window_bounds = array<i64: 1, 128>}, {pipeline_mode = #tpu.pipeline_mode<synchronous>, transform_indices = @transform_3, window_bounds = array<i64: 128, 128>}, {pipeline_mode = #tpu.pipeline_mode<synchronous>, transform_indices = @transform_4, window_bounds = array<i64: 1, 128>}, {transform_indices = @transform_5, window_bounds = array<i64: 32, 128>}]} {
    %c0 = arith.constant 0 : index
    %c0_0 = arith.constant 0 : index
    %0 = vector.load %arg1[%c0, %c0_0] : memref<32x784xf32, #tpu.memory_space<vmem>>, vector<32x784xf32>
    %1 = arith.truncf %0 : vector<32x784xf32> to vector<32x784xbf16>
    %c0_1 = arith.constant 0 : index
    %c0_2 = arith.constant 0 : index
    %2 = vector.load %arg2[%c0_1, %c0_2] : memref<784x128xbf16, #tpu.memory_space<vmem>>, vector<784x128xbf16>
    %cst = arith.constant dense<0.000000e+00> : vector<32x128xf32>
    %3 = tpu.matmul %1, %2, %cst {dimension_numbers = #tpu.dot_dimension_numbers<[1], [0], [0], [1], [0, 0, 1, 1], [], []>} : vector<32x784xbf16>, vector<784x128xbf16>, vector<32x128xf32> -> vector<32x128xf32>
    %c0_3 = arith.constant 0 : index
    %c0_4 = arith.constant 0 : index
    %4 = vector.load %arg3[%c0_3, %c0_4] : memref<1x128xf32, #tpu.memory_space<vmem>>, vector<1x128xf32>
    %5 = vector.broadcast %4 : vector<1x128xf32> to vector<32x128xf32>
    %6 = arith.addf %3, %5 : vector<32x128xf32>
    %cst_5 = arith.constant 0.000000e+00 : f32
    %7 = vector.broadcast %cst_5 : f32 to vector<32x128xf32>
    %8 = arith.maximumf %6, %7 : vector<32x128xf32>
    %9 = arith.truncf %8 : vector<32x128xf32> to vector<32x128xbf16>
    %c0_6 = arith.constant 0 : index
    %c0_7 = arith.constant 0 : index
    %10 = vector.load %arg4[%c0_6, %c0_7] : memref<128x128xbf16, #tpu.memory_space<vmem>>, vector<128x128xbf16>
    %cst_8 = arith.constant dense<0.000000e+00> : vector<32x128xf32>
    %11 = tpu.matmul %9, %10, %cst_8 {dimension_numbers = #tpu.dot_dimension_numbers<[1], [0], [0], [1], [0, 0, 1, 1], [], []>} : vector<32x128xbf16>, vector<128x128xbf16>, vector<32x128xf32> -> vector<32x128xf32>
    %c0_9 = arith.constant 0 : index
    %c0_10 = arith.constant 0 : index
    %12 = vector.load %arg5[%c0_9, %c0_10] : memref<1x128xf32, #tpu.memory_space<vmem>>, vector<1x128xf32>
    %13 = vector.broadcast %12 : vector<1x128xf32> to vector<32x128xf32>
    %14 = arith.addf %11, %13 : vector<32x128xf32>
    %c0_11 = arith.constant 0 : index
    %c0_12 = arith.constant 0 : index
    %15 = vector.load %arg6[%c0_11, %c0_12] : memref<32x128xf32, #tpu.memory_space<vmem>>, vector<32x128xf32>
    tpu.vector_store %arg6[%c0_11, %c0_12], %14 {strides = array<i32>} : memref<32x128xf32, #tpu.memory_space<vmem>>, vector<32x128xf32>,
    return
  }
  func.func @transform_0(%arg0: i32) -> (i32, i32) {
    %c0_i32 = arith.constant 0 : i32
    %c0_i32_0 = arith.constant 0 : i32
    return %arg0, %c0_i32 : i32, i32
  }
  func.func @transform_1(%arg0: i32) -> (i32, i32) {
    %c0_i32 = arith.constant 0 : i32
    %c0_i32_0 = arith.constant 0 : i32
    %c0_i32_1 = arith.constant 0 : i32
    return %c0_i32, %c0_i32_0 : i32, i32
  }
  func.func @transform_2(%arg0: i32) -> (i32, i32) {
    %c0_i32 = arith.constant 0 : i32
    %c0_i32_0 = arith.constant 0 : i32
    %c0_i32_1 = arith.constant 0 : i32
    return %c0_i32, %c0_i32_0 : i32, i32
  }
  func.func @transform_3(%arg0: i32) -> (i32, i32) {
    %c0_i32 = arith.constant 0 : i32
    %c0_i32_0 = arith.constant 0 : i32
    %c0_i32_1 = arith.constant 0 : i32
    return %c0_i32, %c0_i32_0 : i32, i32
  }
  func.func @transform_4(%arg0: i32) -> (i32, i32) {
    %c0_i32 = arith.constant 0 : i32
    %c0_i32_0 = arith.constant 0 : i32
    %c0_i32_1 = arith.constant 0 : i32
    return %c0_i32, %c0_i32_0 : i32, i32
  }
  func.func @transform_5(%arg0: i32) -> (i32, i32) {
    %c0_i32 = arith.constant 0 : i32
    %c0_i32_0 = arith.constant 0 : i32
    return %arg0, %c0_i32 : i32, i32
  }
}

</mosaic_0001>

<llo_original>
// kernel: _net_forward_padded.1
$region0: #{_net_forward_padded.1}
  #allocation0 [shape = 'u32[]', space=smem, size = 0x4, offset = 0x4, fixed_abs, tag = 'smem constant byte address 0x4 - core index']
  #allocation1 [shape = 'u32[144,128]{1,0:T(1,128)}', space=vmem, size = 0x12000, scoped, tag = 'internal scratch']
  %s0 = inlined_call_operand.hbm [shape: f32[32,784], index: 0, kind: input, shape index: {}]
  %s1 = inlined_call_operand.hbm [shape: bf16[784,128], index: 1, kind: input, shape index: {}]
  %s2 = inlined_call_operand.vmem [shape: f32[1,128], index: 2, kind: input, shape index: {}]
  %s3 = inlined_call_operand.hbm [shape: bf16[128,128], index: 3, kind: input, shape index: {}]
  %s4 = inlined_call_operand.vmem [shape: f32[1,128], index: 4, kind: input, shape index: {}]
  %s5 = inlined_call_operand.hbm [shape: f32[32,128], index: 5, kind: output, shape index: {}]
  %s6 = sld [smem:[#allocation0]]
  $region42: #{_net_forward_padded.1} parent=0
    _
  %s8 = ssub.s32 1, %s6
  %s9 = scalar_select 0, %s8, %s6
  $region1: #{_net_forward_padded.1} parent=0
    #allocation2 [shape = 'u8[114688]{0}', space=vmem, size = 0x1c000, scoped, tag = 'input window, operand 0, single buffered']
    #allocation3 [shape = 's32[1]{0}', space=sflag, size = 0x4, scoped, tag = 'scoped memory for _net_forward_padded.1']
    #allocation4 [shape = 's32[1]{0}', space=sflag, size = 0x4, scoped, tag = 'scoped memory for _net_forward_padded.1']
    #allocation5 [shape = 'u8[200704]{0}', space=vmem, size = 0x31000, scoped, tag = 'input window, operand 1, single buffered']
    #allocation6 [shape = 's32[1]{0}', space=sflag, size = 0x4, scoped, tag = 'scoped memory for _net_forward_padded.1']
    #allocation7 [shape = 'u8[32768]{0}', space=vmem, size = 0x8000, scoped, tag = 'input window, operand 3, single buffered']
    #allocation8 [shape = 'u8[16384]{0}', space=vmem, size = 0x4000, scoped, tag = 'output window, operand 0, single buffered']
    %10 = vsyncpa [#allocation3], 0
    %11 = vsyncpa [#allocation6], 0
    %12 = vsyncpa [#allocation4], 0
    // Predicated region
    $region2: #{_net_forward_padded.1} parent=1 // pred_check
      _
    $region3: #{_net_forward_padded.1} parent=1 // pred_check_branch
      %14 = sbr.rel (0) target = $region5
    $region4: #{_net_forward_padded.1} parent=1 // pred_region
      %s16 = ssub.s32 3584, 3584
      %17 = vsyncadd [#allocation3], %s16
      %s18 = sshll.u32 [#allocation2], 4
      %s19 = int_to_ptr.vmem [resolvable:$true] %s18
      %24 = dma.hbm_to_vmem [thread:$0]  %s0, 3584, %s19, [#allocation3], 896, 896, 56
    $region5: #{_net_forward_padded.1} parent=1 // pred_fallthru
      _
    // Predicated region
    $region6: #{_net_forward_padded.1} parent=1 // pred_check
      _
    $region7: #{_net_forward_padded.1} parent=1 // pred_check_branch
      %26 = sbr.rel (0) target = $region9
    $region8: #{_net_forward_padded.1} parent=1 // pred_region
      %s28 = ssub.s32 6272, 6272
      %29 = vsyncadd [#allocation6], %s28
      %s30 = sshll.u32 [#allocation5], 4
      %s31 = int_to_ptr.vmem [resolvable:$true] %s30
      %36 = dma.hbm_to_vmem [thread:$0]  %s1, 6272, %s31, [#allocation6], 64, 64, 4
    $region9: #{_net_forward_padded.1} parent=1 // pred_fallthru
      _
    // Predicated region
    $region10: #{_net_forward_padded.1} parent=1 // pred_check
      _
    $region11: #{_net_forward_padded.1} parent=1 // pred_check_branch
      %38 = sbr.rel (0) target = $region13
    $region12: #{_net_forward_padded.1} parent=1 // pred_region
      _
    $region13: #{_net_forward_padded.1} parent=1 // pred_fallthru
      _
    // Predicated region
    $region14: #{_net_forward_padded.1} parent=1 // pred_check
      _
    $region15: #{_net_forward_padded.1} parent=1 // pred_check_branch
      %40 = sbr.rel (0) target = $region17
    $region16: #{_net_forward_padded.1} parent=1 // pred_region
      %s42 = ssub.s32 1024, 1024
      %43 = vsyncadd [#allocation6], %s42
      %s44 = sshll.u32 [#allocation7], 4
      %s45 = int_to_ptr.vmem [resolvable:$true] %s44
      %50 = dma.hbm_to_vmem [thread:$0]  %s3, 1024, %s45, [#allocation6], 64, 64, 4
    $region17: #{_net_forward_padded.1} parent=1 // pred_fallthru
      _
    // Predicated region
    $region18: #{_net_forward_padded.1} parent=1 // pred_check
      _
    $region19: #{_net_forward_padded.1} parent=1 // pred_check_branch
      %52 = sbr.rel (0) target = $region21
    $region20: #{_net_forward_padded.1} parent=1 // pred_region
      _
    $region21: #{_net_forward_padded.1} parent=1 // pred_fallthru
      _
    // Predicated region
    $region22: #{_net_forward_padded.1} parent=1 // pred_check
      _
    $region23: #{_net_forward_padded.1} parent=1 // pred_check_branch
      %54 = sbr.rel (0) target = $region25
    $region24: #{_net_forward_padded.1} parent=1 // pred_region
      %55 = dma.done [#allocation3], 3584
    $region25: #{_net_forward_padded.1} parent=1 // pred_fallthru
      _
    // Predicated region
    $region26: #{_net_forward_padded.1} parent=1 // pred_check
      _
    $region27: #{_net_forward_padded.1} parent=1 // pred_check_branch
      %57 = sbr.rel (0) target = $region29
    $region28: #{_net_forward_padded.1} parent=1 // pred_region
      %58 = dma.done [#allocation6], 6272
    $region29: #{_net_forward_padded.1} parent=1 // pred_fallthru
      _
    // Predicated region
    $region30: #{_net_forward_padded.1} parent=1 // pred_check
      _
    $region31: #{_net_forward_padded.1} parent=1 // pred_check_branch
      %60 = sbr.rel (0) target = $region33
    $region32: #{_net_forward_padded.1} parent=1 // pred_region
      %61 = dma.done [#allocation6], 1024
    $region33: #{_net_forward_padded.1} parent=1 // pred_fallthru
      _
    %v63 = vld [vmem:[#allocation2] sm:$0xff]
    %v64 = vld [vmem:[#allocation2 + $0x8] sm:$0xff]
    %v65 = vld [vmem:[#allocation2 + $0x10] sm:$0xff]
    %v66 = vld [vmem:[#allocation2 + $0x18] sm:$0xff]
    %v67 = vld [vmem:[#allocation2 + $0x20] sm:$0xff]
    %v68 = vld [vmem:[#allocation2 + $0x28] sm:$0xff]
    %v69 = vld [vmem:[#allocation2 + $0x30] sm:$0xff]
    %v70 = vld [vmem:[#allocation2 + $0x38] sm:$0xff]
    %v71 = vld [vmem:[#allocation2 + $0x40] sm:$0xff]
    %v72 = vld [vmem:[#allocation2 + $0x48] sm:$0xff]
    %v73 = vld [vmem:[#allocation2 + $0x50] sm:$0xff]
    %v74 = vld [vmem:[#allocation2 + $0x58] sm:$0xff]
    %v75 = vld [vmem:[#allocation2 + $0x60] sm:$0xff]
    %v76 = vld [vmem:[#allocation2 + $0x68] sm:$0xff]
    %v77 = vld [vmem:[#allocation2 + $0x70] sm:$0xff]
    %v78 = vld [vmem:[#allocation2 + $0x78] sm:$0xff]
    %v79 = vld [vmem:[#allocation2 + $0x80] sm:$0xff]
    %v80 = vld [vmem:[#allocation2 + $0x88] sm:$0xff]
    %v81 = vld [vmem:[#allocation2 + $0x90] sm:$0xff]
    %v82 = vld [vmem:[#allocation2 + $0x98] sm:$0xff]
    %v83 = vld [vmem:[#allocation2 + $0xa0] sm:$0xff]
    %v84 = vld [vmem:[#allocation2 + $0xa8] sm:$0xff]
    %v85 = vld [vmem:[#allocation2 + $0xb0] sm:$0xff]
    %v86 = vld [vmem:[#allocation2 + $0xb8] sm:$0xff]
    %v87 = vld [vmem:[#allocation2 + $0xc0] sm:$0xff]
    %v88 = vld [vmem:[#allocation2 + $0xc8] sm:$0xff]
    %v89 = vld [vmem:[#allocation2 + $0xd0] sm:$0xff]
    %v90 = vld [vmem:[#allocation2 + $0xd8] sm:$0xff]
    %v91 = vpack.c.bf16 %v70, %v63
    %v92 = vpack.c.bf16 %v71, %v64
    %v93 = vpack.c.bf16 %v72, %v65
    %v94 = vpack.c.bf16 %v73, %v66
    %v95 = vpack.c.bf16 %v74, %v67
    %v96 = vpack.c.bf16 %v75, %v68
    %v97 = vpack.c.bf16 %v76, %v69
    %v98 = vpack.c.bf16 %v84, %v77
    %v99 = vpack.c.bf16 %v85, %v78
    %v100 = vpack.c.bf16 %v86, %v79
    %v101 = vpack.c.bf16 %v87, %v80
    %v102 = vpack.c.bf16 %v88, %v81
    %v103 = vpack.c.bf16 %v89, %v82
    %v104 = vpack.c.bf16 %v90, %v83
    %v105 = vld [vmem:[#allocation5] sm:$0xf]
    %v106 = vld [vmem:[#allocation5 + $0x4] sm:$0xf]
    %v107 = vld [vmem:[#allocation5 + $0x8] sm:$0xf]
    %v108 = vld [vmem:[#allocation5 + $0xc] sm:$0xf]
    %v109 = vld [vmem:[#allocation5 + $0x10] sm:$0xf]
    %v110 = vld [vmem:[#allocation5 + $0x14] sm:$0xf]
    %v111 = vld [vmem:[#allocation5 + $0x18] sm:$0xf]
    %v112 = vld [vmem:[#allocation5 + $0x1c] sm:$0xf]
    %v113 = vld [vmem:[#allocation5 + $0x20] sm:$0xf]
    %v114 = vld [vmem:[#allocation5 + $0x24] sm:$0xf]
    %v115 = vld [vmem:[#allocation5 + $0x28] sm:$0xf]
    %v116 = vld [vmem:[#allocation5 + $0x2c] sm:$0xf]
    %v117 = vld [vmem:[#allocation5 + $0x30] sm:$0xf]
    %v118 = vld [vmem:[#allocation5 + $0x34] sm:$0xf]
    %v119 = vld [vmem:[#allocation5 + $0x38] sm:$0xf]
    %v120 = vld [vmem:[#allocation5 + $0x3c] sm:$0xf]
    %v121 = vld [vmem:[#allocation5 + $0x40] sm:$0xf]
    %v122 = vld [vmem:[#allocation5 + $0x44] sm:$0xf]
    %v123 = vld [vmem:[#allocation5 + $0x48] sm:$0xf]
    %v124 = vld [vmem:[#allocation5 + $0x4c] sm:$0xf]
    %v125 = vld [vmem:[#allocation5 + $0x50] sm:$0xf]
    %v126 = vld [vmem:[#allocation5 + $0x54] sm:$0xf]
    %v127 = vld [vmem:[#allocation5 + $0x58] sm:$0xf]
    %v128 = vld [vmem:[#allocation5 + $0x5c] sm:$0xf]
    %v129 = vld [vmem:[#allocation5 + $0x60] sm:$0xf]
    %v130 = vld [vmem:[#allocation5 + $0x64] sm:$0xf]
    %v131 = vld [vmem:[#allocation5 + $0x68] sm:$0xf]
    %v132 = vld [vmem:[#allocation5 + $0x6c] sm:$0xf]
    %v133 = vld [vmem:[#allocation5 + $0x70] sm:$0xf]
    %v134 = vld [vmem:[#allocation5 + $0x74] sm:$0xf]
    %v135 = vld [vmem:[#allocation5 + $0x78] sm:$0xf]
    %v136 = vld [vmem:[#allocation5 + $0x7c] sm:$0xf]
    %v137 = vld [vmem:[#allocation5 + $0x80] sm:$0xf]
    %v138 = vld [vmem:[#allocation5 + $0x84] sm:$0xf]
    %v139 = vld [vmem:[#allocation5 + $0x88] sm:$0xf]
    %v140 = vld [vmem:[#allocation5 + $0x8c] sm:$0xf]
    %v141 = vld [vmem:[#allocation5 + $0x90] sm:$0xf]
    %v142 = vld [vmem:[#allocation5 + $0x94] sm:$0xf]
    %v143 = vld [vmem:[#allocation5 + $0x98] sm:$0xf]
    %v144 = vld [vmem:[#allocation5 + $0x9c] sm:$0xf]
    %v145 = vld [vmem:[#allocation5 + $0xa0] sm:$0xf]
    %v146 = vld [vmem:[#allocation5 + $0xa4] sm:$0xf]
    %v147 = vld [vmem:[#allocation5 + $0xa8] sm:$0xf]
    %v148 = vld [vmem:[#allocation5 + $0xac] sm:$0xf]
    %v149 = vld [vmem:[#allocation5 + $0xb0] sm:$0xf]
    %v150 = vld [vmem:[#allocation5 + $0xb4] sm:$0xf]
    %v151 = vld [vmem:[#allocation5 + $0xb8] sm:$0xf]
    %v152 = vld [vmem:[#allocation5 + $0xbc] sm:$0xf]
    %v153 = vld [vmem:[#allocation5 + $0xc0] sm:$0xf]
    %v154 = vld [vmem:[#allocation5 + $0xc4] sm:$0xf]
    %v155 = vld [vmem:[#allocation5 + $0xc8] sm:$0xf]
    %v156 = vld [vmem:[#allocation5 + $0xcc] sm:$0xf]
    %v157 = vld [vmem:[#allocation5 + $0xd0] sm:$0xf]
    %v158 = vld [vmem:[#allocation5 + $0xd4] sm:$0xf]
    %v159 = vld [vmem:[#allocation5 + $0xd8] sm:$0xf]
    %v160 = vld [vmem:[#allocation5 + $0xdc] sm:$0xf]
    %v161 = vld [vmem:[#allocation5 + $0xe0] sm:$0xf]
    %v162 = vld [vmem:[#allocation5 + $0xe4] sm:$0xf]
    %v163 = vld [vmem:[#allocation5 + $0xe8] sm:$0xf]
    %v164 = vld [vmem:[#allocation5 + $0xec] sm:$0xf]
    %v165 = vld [vmem:[#allocation5 + $0xf0] sm:$0xf]
    %v166 = vld [vmem:[#allocation5 + $0xf4] sm:$0xf]
    %v167 = vld [vmem:[#allocation5 + $0xf8] sm:$0xf]
    %v168 = vld [vmem:[#allocation5 + $0xfc] sm:$0xf]
    %v169 = vld [vmem:[#allocation5 + $0x100] sm:$0xf]
    %v170 = vld [vmem:[#allocation5 + $0x104] sm:$0xf]
    %v171 = vld [vmem:[#allocation5 + $0x108] sm:$0xf]
    %v172 = vld [vmem:[#allocation5 + $0x10c] sm:$0xf]
    %v173 = vld [vmem:[#allocation5 + $0x110] sm:$0xf]
    %v174 = vld [vmem:[#allocation5 + $0x114] sm:$0xf]
    %v175 = vld [vmem:[#allocation5 + $0x118] sm:$0xf]
    %v176 = vld [vmem:[#allocation5 + $0x11c] sm:$0xf]
    %v177 = vld [vmem:[#allocation5 + $0x120] sm:$0xf]
    %v178 = vld [vmem:[#allocation5 + $0x124] sm:$0xf]
    %v179 = vld [vmem:[#allocation5 + $0x128] sm:$0xf]
    %v180 = vld [vmem:[#allocation5 + $0x12c] sm:$0xf]
    %v181 = vld [vmem:[#allocation5 + $0x130] sm:$0xf]
    %v182 = vld [vmem:[#allocation5 + $0x134] sm:$0xf]
    %v183 = vld [vmem:[#allocation5 + $0x138] sm:$0xf]
    %v184 = vld [vmem:[#allocation5 + $0x13c] sm:$0xf]
    %v185 = vld [vmem:[#allocation5 + $0x140] sm:$0xf]
    %v186 = vld [vmem:[#allocation5 + $0x144] sm:$0xf]
    %v187 = vld [vmem:[#allocation5 + $0x148] sm:$0xf]
    %v188 = vld [vmem:[#allocation5 + $0x14c] sm:$0xf]
    %v189 = vld [vmem:[#allocation5 + $0x150] sm:$0xf]
    %v190 = vld [vmem:[#allocation5 + $0x154] sm:$0xf]
    %v191 = vld [vmem:[#allocation5 + $0x158] sm:$0xf]
    %v192 = vld [vmem:[#allocation5 + $0x15c] sm:$0xf]
    %v193 = vld [vmem:[#allocation5 + $0x160] sm:$0xf]
    %v194 = vld [vmem:[#allocation5 + $0x164] sm:$0xf]
    %v195 = vld [vmem:[#allocation5 + $0x168] sm:$0xf]
    %v196 = vld [vmem:[#allocation5 + $0x16c] sm:$0xf]
    %v197 = vld [vmem:[#allocation5 + $0x170] sm:$0xf]
    %v198 = vld [vmem:[#allocation5 + $0x174] sm:$0xf]
    %v199 = vld [vmem:[#allocation5 + $0x178] sm:$0xf]
    %v200 = vld [vmem:[#allocation5 + $0x17c] sm:$0xf]
    %v201 = vld [vmem:[#allocation5 + $0x180] sm:$0xf]
    %v202 = vld [vmem:[#allocation5 + $0x184] sm:$0xf]
    %v203 = vld [vmem:[%s2] sm:$0x1]
    %v205 = vlaneseq
    %v206 = vshrl.u32 %v205, 7
    %v207 = vsub.s32 0, %v206
    %v208 = vrot.slane %v203, %v207
    %v308 = vunpack.c.l.b16 %v105
    %v309 = vunpack.c.l.b16 %v106
    %v310 = vunpack.c.l.b16 %v107
    %v311 = vunpack.c.l.b16 %v108
    %v312 = vunpack.c.l.b16 %v109
    %v313 = vunpack.c.l.b16 %v110
    %v314 = vunpack.c.l.b16 %v111
    %v315 = vunpack.c.l.b16 %v112
    %v316 = vunpack.c.l.b16 %v113
    %v317 = vunpack.c.l.b16 %v114
    %v318 = vunpack.c.l.b16 %v115
    %v319 = vunpack.c.l.b16 %v116
    %v320 = vunpack.c.l.b16 %v117
    %v321 = vunpack.c.l.b16 %v118
    %v322 = vunpack.c.l.b16 %v119
    %v323 = vunpack.c.l.b16 %v120
    %v324 = vunpack.c.l.b16 %v121
    %v325 = vunpack.c.l.b16 %v122
    %v326 = vunpack.c.l.b16 %v123
    %v327 = vunpack.c.l.b16 %v124
    %v328 = vunpack.c.l.b16 %v125
    %v329 = vunpack.c.l.b16 %v126
    %v330 = vunpack.c.l.b16 %v127
    %v331 = vunpack.c.l.b16 %v128
    %v332 = vunpack.c.l.b16 %v129
    %v333 = vunpack.c.l.b16 %v130
    %v334 = vunpack.c.l.b16 %v131
    %v335 = vunpack.c.l.b16 %v132
    %v336 = vunpack.c.l.b16 %v133
    %v337 = vunpack.c.l.b16 %v134
    %v338 = vunpack.c.l.b16 %v135
    %v339 = vunpack.c.l.b16 %v136
    %v340 = vunpack.c.l.b16 %v137
    %v341 = vunpack.c.l.b16 %v138
    %v342 = vunpack.c.l.b16 %v139
    %v343 = vunpack.c.l.b16 %v140
    %v344 = vunpack.c.l.b16 %v141
    %v345 = vunpack.c.l.b16 %v142
    %v346 = vunpack.c.l.b16 %v143
    %v347 = vunpack.c.l.b16 %v144
    %v348 = vunpack.c.l.b16 %v145
    %v349 = vunpack.c.l.b16 %v146
    %v350 = vunpack.c.l.b16 %v147
    %v351 = vunpack.c.l.b16 %v148
    %v352 = vunpack.c.l.b16 %v149
    %v353 = vunpack.c.l.b16 %v150
    %v354 = vunpack.c.l.b16 %v151
    %v355 = vunpack.c.l.b16 %v152
    %v356 = vunpack.c.l.b16 %v153
    %v357 = vunpack.c.l.b16 %v154
    %v358 = vunpack.c.l.b16 %v155
    %v359 = vunpack.c.l.b16 %v156
    %v360 = vunpack.c.l.b16 %v157
    %v361 = vunpack.c.l.b16 %v158
    %v362 = vunpack.c.l.b16 %v159
    %v363 = vunpack.c.l.b16 %v160
    %v364 = vunpack.c.l.b16 %v161
    %v365 = vunpack.c.l.b16 %v162
    %v366 = vunpack.c.l.b16 %v163
    %v367 = vunpack.c.l.b16 %v164
    %v368 = vunpack.c.l.b16 %v165
    %v369 = vunpack.c.l.b16 %v166
    %v370 = vunpack.c.l.b16 %v167
    %v371 = vunpack.c.l.b16 %v168
    %v372 = vunpack.c.l.b16 %v169
    %v373 = vunpack.c.l.b16 %v170
    %v374 = vunpack.c.l.b16 %v171
    %v375 = vunpack.c.l.b16 %v172
    %v376 = vunpack.c.l.b16 %v173
    %v377 = vunpack.c.l.b16 %v174
    %v378 = vunpack.c.l.b16 %v175
    %v379 = vunpack.c.l.b16 %v176
    %v380 = vunpack.c.l.b16 %v177
    %v381 = vunpack.c.l.b16 %v178
    %v382 = vunpack.c.l.b16 %v179
    %v383 = vunpack.c.l.b16 %v180
    %v384 = vunpack.c.l.b16 %v181
    %v385 = vunpack.c.l.b16 %v182
    %v386 = vunpack.c.l.b16 %v183
    %v387 = vunpack.c.l.b16 %v184
    %v388 = vunpack.c.l.b16 %v185
    %v389 = vunpack.c.l.b16 %v186
    %v390 = vunpack.c.l.b16 %v187
    %v391 = vunpack.c.l.b16 %v188
    %v392 = vunpack.c.l.b16 %v189
    %v393 = vunpack.c.l.b16 %v190
    %v394 = vunpack.c.l.b16 %v191
    %v395 = vunpack.c.l.b16 %v192
    %v396 = vunpack.c.l.b16 %v193
    %v397 = vunpack.c.l.b16 %v194
    %v398 = vunpack.c.l.b16 %v195
    %v399 = vunpack.c.l.b16 %v196
    %v400 = vunpack.c.l.b16 %v197
    %v401 = vunpack.c.l.b16 %v198
    %v402 = vunpack.c.l.b16 %v199
    %v403 = vunpack.c.l.b16 %v200
    %v404 = vunpack.c.l.b16 %v201
    %v405 = vunpack.c.l.b16 %v202
    %v406 = vpack.c.b16 %v309, %v308
    %v407 = vpack.c.b16 %v311, %v310
    %v408 = vpack.c.b16 %v313, %v312
    %v409 = vpack.c.b16 %v315, %v314
    %v410 = vpack.c.b16 %v317, %v316
    %v411 = vpack.c.b16 %v319, %v318
    %v412 = vpack.c.b16 %v321, %v320
    %v413 = vpack.c.b16 %v323, %v322
    %v414 = vpack.c.b16 %v325, %v324
    %v415 = vpack.c.b16 %v327, %v326
    %v416 = vpack.c.b16 %v329, %v328
    %v417 = vpack.c.b16 %v331, %v330
    %v418 = vpack.c.b16 %v333, %v332
    %v419 = vpack.c.b16 %v335, %v334
    %v420 = vpack.c.b16 %v337, %v336
    %v421 = vpack.c.b16 %v339, %v338
    %v422 = vpack.c.b16 %v341, %v340
    %v423 = vpack.c.b16 %v343, %v342
    %v424 = vpack.c.b16 %v345, %v344
    %v425 = vpack.c.b16 %v347, %v346
    %v426 = vpack.c.b16 %v349, %v348
    %v427 = vpack.c.b16 %v351, %v350
    %v428 = vpack.c.b16 %v353, %v352
    %v429 = vpack.c.b16 %v355, %v354
    %v430 = vpack.c.b16 %v357, %v356
    %v431 = vpack.c.b16 %v359, %v358
    %v432 = vpack.c.b16 %v361, %v360
    %v433 = vpack.c.b16 %v363, %v362
    %v434 = vpack.c.b16 %v365, %v364
    %v435 = vpack.c.b16 %v367, %v366
    %v436 = vpack.c.b16 %v369, %v368
    %v437 = vpack.c.b16 %v371, %v370
    %v438 = vpack.c.b16 %v373, %v372
    %v439 = vpack.c.b16 %v375, %v374
    %v440 = vpack.c.b16 %v377, %v376
    %v441 = vpack.c.b16 %v379, %v378
    %v442 = vpack.c.b16 %v381, %v380
    %v443 = vpack.c.b16 %v383, %v382
    %v444 = vpack.c.b16 %v385, %v384
    %v445 = vpack.c.b16 %v387, %v386
    %v446 = vpack.c.b16 %v389, %v388
    %v447 = vpack.c.b16 %v391, %v390
    %v448 = vpack.c.b16 %v393, %v392
    %v449 = vpack.c.b16 %v395, %v394
    %v450 = vpack.c.b16 %v397, %v396
    %v451 = vpack.c.b16 %v399, %v398
    %v452 = vpack.c.b16 %v401, %v400
    %v453 = vpack.c.b16 %v403, %v402
    %v454 = vpack.c.b16 %v405, %v404
    %vm504 = vcmask 130048
    %v506 = vsel %vm504, %v97, 0
    %v509 = vsel %vm504, %v104, 0
    %511 = vmatprep.subr.bf16.mxu0 0
    %512 = vmatpush1.bf16.msra.mxu0 %v406
    %513 = vmatprep.subr.bf16.mxu0 0
    %514 = vmatpush1.bf16.msra.mxu0 %v407
    %515 = vmatprep.subr.bf16.mxu0 0
    %516 = vmatpush1.bf16.msra.mxu0 %v408
    %517 = vmatprep.subr.bf16.mxu0 0
    %518 = vmatpush1.bf16.msra.mxu0 %v409
    %519 = vmatprep.subr.bf16.mxu0 0
    %520 = vmatpush1.bf16.msra.mxu0 %v410
    %521 = vmatprep.subr.bf16.mxu0 0
    %522 = vmatpush1.bf16.msra.mxu0 %v411
    %523 = vmatprep.subr.bf16.mxu0 0
    %524 = vmatpush1.bf16.msra.mxu0 %v412
    %525 = vmatprep.subr.bf16.mxu0 0
    %526 = vmatpush1.bf16.msra.mxu0 %v413
    %527 = vmatprep.subr.bf16.mxu0 0
    %528 = vmatpush1.bf16.msra.mxu0 %v414
    %529 = vmatprep.subr.bf16.mxu0 0
    %530 = vmatpush1.bf16.msra.mxu0 %v415
    %531 = vmatprep.subr.bf16.mxu0 0
    %532 = vmatpush1.bf16.msra.mxu0 %v416
    %533 = vmatprep.subr.bf16.mxu0 0
    %534 = vmatpush1.bf16.msra.mxu0 %v417
    %535 = vmatprep.subr.bf16.mxu0 0
    %536 = vmatpush1.bf16.msra.mxu0 %v418
    %537 = vmatprep.subr.bf16.mxu0 0
    %538 = vmatpush1.bf16.msra.mxu0 %v419
    %539 = vmatprep.subr.bf16.mxu0 0
    %540 = vmatpush1.bf16.msra.mxu0 %v420
    %541 = vmatprep.subr.bf16.mxu0 0
    %542 = vmatpush1.bf16.msra.mxu0 %v421
    %543 = vmatprep.mubr.bf16.mxu0 %v92
    %544 = vmatmul.mubr.bf16.gmra.mrb[0].mxu0 %v91
    %v545 = vpop.f32.mrb[0].mxu0
    %v546 = vadd.f32 %v208, %v545
    %v547 = vpop.f32.mrb[0].mxu0
    %v548 = vpop.f32.mrb[0].mxu0
    %v549 = vadd.f32 %v208, %v548
    %v550 = vpop.f32.mrb[0].mxu0
    %551 = vmatprep.mubr.bf16.mxu0 %v99
    %552 = vmatmul.mubr.bf16.gmra.mrb[0].mxu0 %v98
    %v553 = vpop.f32.mrb[0].mxu0
    %v554 = vadd.f32 %v208, %v553
    %v555 = vpop.f32.mrb[0].mxu0
    %v556 = vpop.f32.mrb[0].mxu0
    %v557 = vadd.f32 %v208, %v556
    %v558 = vpop.f32.mrb[0].mxu0
    %559 = vdwg.mxu0
    %560 = vmatprep.subr.bf16.mxu0 0
    %561 = vmatpush1.bf16.msra.mxu0 %v422
    %562 = vmatprep.subr.bf16.mxu0 0
    %563 = vmatpush1.bf16.msra.mxu0 %v423
    %564 = vmatprep.subr.bf16.mxu0 0
    %565 = vmatpush1.bf16.msra.mxu0 %v424
    %566 = vmatprep.subr.bf16.mxu0 0
    %567 = vmatpush1.bf16.msra.mxu0 %v425
    %568 = vmatprep.subr.bf16.mxu0 0
    %569 = vmatpush1.bf16.msra.mxu0 %v426
    %570 = vmatprep.subr.bf16.mxu0 0
    %571 = vmatpush1.bf16.msra.mxu0 %v427
    %572 = vmatprep.subr.bf16.mxu0 0
    %573 = vmatpush1.bf16.msra.mxu0 %v428
    %574 = vmatprep.subr.bf16.mxu0 0
    %575 = vmatpush1.bf16.msra.mxu0 %v429
    %576 = vmatprep.subr.bf16.mxu0 0
    %577 = vmatpush1.bf16.msra.mxu0 %v430
    %578 = vmatprep.subr.bf16.mxu0 0
    %579 = vmatpush1.bf16.msra.mxu0 %v431
    %580 = vmatprep.subr.bf16.mxu0 0
    %581 = vmatpush1.bf16.msra.mxu0 %v432
    %582 = vmatprep.subr.bf16.mxu0 0
    %583 = vmatpush1.bf16.msra.mxu0 %v433
    %584 = vmatprep.subr.bf16.mxu0 0
    %585 = vmatpush1.bf16.msra.mxu0 %v434
    %586 = vmatprep.subr.bf16.mxu0 0
    %587 = vmatpush1.bf16.msra.mxu0 %v435
    %588 = vmatprep.subr.bf16.mxu0 0
    %589 = vmatpush1.bf16.msra.mxu0 %v436
    %590 = vmatprep.subr.bf16.mxu0 0
    %591 = vmatpush1.bf16.msra.mxu0 %v437
    %592 = vmatprep.mubr.bf16.mxu0 %v94
    %593 = vmatmul.mubr.bf16.gmra.mrb[0].mxu0 %v93
    %v594 = vpop.f32.mrb[0].mxu0
    %v595 = vadd.f32 %v546, %v594
    %v596 = vpop.f32.mrb[0].mxu0
    %v597 = vpop.f32.mrb[0].mxu0
    %v598 = vadd.f32 %v549, %v597
    %v599 = vpop.f32.mrb[0].mxu0
    %600 = vmatprep.mubr.bf16.mxu0 %v101
    %601 = vmatmul.mubr.bf16.gmra.mrb[0].mxu0 %v100
    %v602 = vpop.f32.mrb[0].mxu0
    %v603 = vadd.f32 %v554, %v602
    %v604 = vpop.f32.mrb[0].mxu0
    %v605 = vpop.f32.mrb[0].mxu0
    %v606 = vadd.f32 %v557, %v605
    %v607 = vpop.f32.mrb[0].mxu0
    %608 = vdwg.mxu0
    %609 = vmatprep.subr.bf16.mxu0 0
    %610 = vmatpush1.bf16.msra.mxu0 %v438
    %611 = vmatprep.subr.bf16.mxu0 0
    %612 = vmatpush1.bf16.msra.mxu0 %v439
    %613 = vmatprep.subr.bf16.mxu0 0
    %614 = vmatpush1.bf16.msra.mxu0 %v440
    %615 = vmatprep.subr.bf16.mxu0 0
    %616 = vmatpush1.bf16.msra.mxu0 %v441
    %617 = vmatprep.subr.bf16.mxu0 0
    %618 = vmatpush1.bf16.msra.mxu0 %v442
    %619 = vmatprep.subr.bf16.mxu0 0
    %620 = vmatpush1.bf16.msra.mxu0 %v443
    %621 = vmatprep.subr.bf16.mxu0 0
    %622 = vmatpush1.bf16.msra.mxu0 %v444
    %623 = vmatprep.subr.bf16.mxu0 0
    %624 = vmatpush1.bf16.msra.mxu0 %v445
    %625 = vmatprep.subr.bf16.mxu0 0
    %626 = vmatpush1.bf16.msra.mxu0 %v446
    %627 = vmatprep.subr.bf16.mxu0 0
    %628 = vmatpush1.bf16.msra.mxu0 %v447
    %629 = vmatprep.subr.bf16.mxu0 0
    %630 = vmatpush1.bf16.msra.mxu0 %v448
    %631 = vmatprep.subr.bf16.mxu0 0
    %632 = vmatpush1.bf16.msra.mxu0 %v449
    %633 = vmatprep.subr.bf16.mxu0 0
    %634 = vmatpush1.bf16.msra.mxu0 %v450
    %635 = vmatprep.subr.bf16.mxu0 0
    %636 = vmatpush1.bf16.msra.mxu0 %v451
    %637 = vmatprep.subr.bf16.mxu0 0
    %638 = vmatpush1.bf16.msra.mxu0 %v452
    %639 = vmatprep.subr.bf16.mxu0 0
    %640 = vmatpush1.bf16.msra.mxu0 %v453
    %641 = vmatprep.mubr.bf16.mxu0 %v96
    %642 = vmatmul.mubr.bf16.gmra.mrb[0].mxu0 %v95
    %v643 = vpop.f32.mrb[0].mxu0
    %v644 = vadd.f32 %v595, %v643
    %v645 = vpop.f32.mrb[0].mxu0
    %v646 = vpop.f32.mrb[0].mxu0
    %v647 = vadd.f32 %v598, %v646
    %v648 = vpop.f32.mrb[0].mxu0
    %649 = vmatprep.mubr.bf16.mxu0 %v103
    %650 = vmatmul.mubr.bf16.gmra.mrb[0].mxu0 %v102
    %v651 = vpop.f32.mrb[0].mxu0
    %v652 = vadd.f32 %v603, %v651
    %v653 = vpop.f32.mrb[0].mxu0
    %v654 = vpop.f32.mrb[0].mxu0
    %v655 = vadd.f32 %v606, %v654
    %v656 = vpop.f32.mrb[0].mxu0
    %657 = vdwg.mxu0
    %658 = vmatprep.subr.bf16.mxu0 0
    %659 = vmatpush1.bf16.msra.mxu0 %v454
    %660 = vmatprep.subr.bf16.mxu0 0
    %661 = vmatpush1.bf16.msra.mxu0 0
    %662 = vmatprep.subr.bf16.mxu0 0
    %663 = vmatpush1.bf16.msra.mxu0 0
    %664 = vmatprep.subr.bf16.mxu0 0
    %665 = vmatpush1.bf16.msra.mxu0 0
    %666 = vmatprep.subr.bf16.mxu0 0
    %667 = vmatpush1.bf16.msra.mxu0 0
    %668 = vmatprep.subr.bf16.mxu0 0
    %669 = vmatpush1.bf16.msra.mxu0 0
    %670 = vmatprep.subr.bf16.mxu0 0
    %671 = vmatpush1.bf16.msra.mxu0 0
    %672 = vmatprep.subr.bf16.mxu0 0
    %673 = vmatpush1.bf16.msra.mxu0 0
    %674 = vmatprep.subr.bf16.mxu0 0
    %675 = vmatpush1.bf16.msra.mxu0 0
    %676 = vmatprep.subr.bf16.mxu0 0
    %677 = vmatpush1.bf16.msra.mxu0 0
    %678 = vmatprep.subr.bf16.mxu0 0
    %679 = vmatpush1.bf16.msra.mxu0 0
    %680 = vmatprep.subr.bf16.mxu0 0
    %681 = vmatpush1.bf16.msra.mxu0 0
    %682 = vmatprep.subr.bf16.mxu0 0
    %683 = vmatpush1.bf16.msra.mxu0 0
    %684 = vmatprep.subr.bf16.mxu0 0
    %685 = vmatpush1.bf16.msra.mxu0 0
    %686 = vmatprep.subr.bf16.mxu0 0
    %687 = vmatpush1.bf16.msra.mxu0 0
    %688 = vmatprep.subr.bf16.mxu0 0
    %689 = vmatpush1.bf16.msra.mxu0 0
    %690 = vmatprep.mubr.bf16.mxu0 0
    %691 = vmatmul.mubr.bf16.gmra.mrb[0].mxu0 %v506
    %v692 = vpop.f32.mrb[0].mxu0
    %v693 = vadd.f32 %v644, %v692
    %v694 = vpop.f32.mrb[0].mxu0
    %v695 = vpop.f32.mrb[0].mxu0
    %v696 = vadd.f32 %v647, %v695
    %v697 = vpop.f32.mrb[0].mxu0
    %698 = vmatprep.mubr.bf16.mxu0 0
    %699 = vmatmul.mubr.bf16.gmra.mrb[0].mxu0 %v509
    %v700 = vpop.f32.mrb[0].mxu0
    %v701 = vadd.f32 %v652, %v700
    %v702 = vpop.f32.mrb[0].mxu0
    %v703 = vpop.f32.mrb[0].mxu0
    %v704 = vadd.f32 %v655, %v703
    %v705 = vpop.f32.mrb[0].mxu0
    %706 = vdwg.mxu0
    %v707 = vmax.f32 %v693, 0.0
    %v708 = vmax.f32 %v696, 0.0
    %v709 = vmax.f32 %v701, 0.0
    %v710 = vmax.f32 %v704, 0.0
    %v711 = vpack.c.bf16 %v708, %v707
    %v712 = vpack.c.bf16 %v710, %v709
    %v713 = vld [vmem:[#allocation7] sm:$0xf]
    %v714 = vld [vmem:[#allocation7 + $0x4] sm:$0xf]
    %v715 = vld [vmem:[#allocation7 + $0x8] sm:$0xf]
    %v716 = vld [vmem:[#allocation7 + $0xc] sm:$0xf]
    %v717 = vld [vmem:[#allocation7 + $0x10] sm:$0xf]
    %v718 = vld [vmem:[#allocation7 + $0x14] sm:$0xf]
    %v719 = vld [vmem:[#allocation7 + $0x18] sm:$0xf]
    %v720 = vld [vmem:[#allocation7 + $0x1c] sm:$0xf]
    %v721 = vld [vmem:[#allocation7 + $0x20] sm:$0xf]
    %v722 = vld [vmem:[#allocation7 + $0x24] sm:$0xf]
    %v723 = vld [vmem:[#allocation7 + $0x28] sm:$0xf]
    %v724 = vld [vmem:[#allocation7 + $0x2c] sm:$0xf]
    %v725 = vld [vmem:[#allocation7 + $0x30] sm:$0xf]
    %v726 = vld [vmem:[#allocation7 + $0x34] sm:$0xf]
    %v727 = vld [vmem:[#allocation7 + $0x38] sm:$0xf]
    %v728 = vld [vmem:[#allocation7 + $0x3c] sm:$0xf]
    %v729 = vld [vmem:[%s4] sm:$0x1]
    %v731 = vlaneseq
    %v732 = vshrl.u32 %v731, 7
    %v733 = vsub.s32 0, %v732
    %v734 = vrot.slane %v729, %v733
    %v752 = vunpack.c.l.b16 %v713
    %v753 = vunpack.c.l.b16 %v714
    %v754 = vunpack.c.l.b16 %v715
    %v755 = vunpack.c.l.b16 %v716
    %v756 = vunpack.c.l.b16 %v717
    %v757 = vunpack.c.l.b16 %v718
    %v758 = vunpack.c.l.b16 %v719
    %v759 = vunpack.c.l.b16 %v720
    %v760 = vunpack.c.l.b16 %v721
    %v761 = vunpack.c.l.b16 %v722
    %v762 = vunpack.c.l.b16 %v723
    %v763 = vunpack.c.l.b16 %v724
    %v764 = vunpack.c.l.b16 %v725
    %v765 = vunpack.c.l.b16 %v726
    %v766 = vunpack.c.l.b16 %v727
    %v767 = vunpack.c.l.b16 %v728
    %v768 = vpack.c.b16 %v753, %v752
    %v769 = vpack.c.b16 %v755, %v754
    %v770 = vpack.c.b16 %v757, %v756
    %v771 = vpack.c.b16 %v759, %v758
    %v772 = vpack.c.b16 %v761, %v760
    %v773 = vpack.c.b16 %v763, %v762
    %v774 = vpack.c.b16 %v765, %v764
    %v775 = vpack.c.b16 %v767, %v766
    %784 = vmatprep.subr.bf16.mxu0 0
    %785 = vmatpush1.bf16.msra.mxu0 %v768
    %786 = vmatprep.subr.bf16.mxu0 0
    %787 = vmatpush1.bf16.msra.mxu0 %v769
    %788 = vmatprep.subr.bf16.mxu0 0
    %789 = vmatpush1.bf16.msra.mxu0 %v770
    %790 = vmatprep.subr.bf16.mxu0 0
    %791 = vmatpush1.bf16.msra.mxu0 %v771
    %792 = vmatprep.subr.bf16.mxu0 0
    %793 = vmatpush1.bf16.msra.mxu0 %v772
    %794 = vmatprep.subr.bf16.mxu0 0
    %795 = vmatpush1.bf16.msra.mxu0 %v773
    %796 = vmatprep.subr.bf16.mxu0 0
    %797 = vmatpush1.bf16.msra.mxu0 %v774
    %798 = vmatprep.subr.bf16.mxu0 0
    %799 = vmatpush1.bf16.msra.mxu0 %v775
    %800 = vmatprep.subr.bf16.mxu0 0
    %801 = vmatpush1.bf16.msra.mxu0 0
    %802 = vmatprep.subr.bf16.mxu0 0
    %803 = vmatpush1.bf16.msra.mxu0 0
    %804 = vmatprep.subr.bf16.mxu0 0
    %805 = vmatpush1.bf16.msra.mxu0 0
    %806 = vmatprep.subr.bf16.mxu0 0
    %807 = vmatpush1.bf16.msra.mxu0 0
    %808 = vmatprep.subr.bf16.mxu0 0
    %809 = vmatpush1.bf16.msra.mxu0 0
    %810 = vmatprep.subr.bf16.mxu0 0
    %811 = vmatpush1.bf16.msra.mxu0 0
    %812 = vmatprep.subr.bf16.mxu0 0
    %813 = vmatpush1.bf16.msra.mxu0 0
    %814 = vmatprep.subr.bf16.mxu0 0
    %815 = vmatpush1.bf16.msra.mxu0 0
    %816 = vmatprep.mubr.bf16.mxu0 0
    %817 = vmatmul.mubr.bf16.gmra.mrb[0].mxu0 %v711
    %v818 = vpop.f32.mrb[0].mxu0
    %v819 = vadd.f32 %v734, %v818
    %v820 = vpop.f32.mrb[0].mxu0
    %v821 = vpop.f32.mrb[0].mxu0
    %v822 = vadd.f32 %v734, %v821
    %v823 = vpop.f32.mrb[0].mxu0
    %824 = vmatprep.mubr.bf16.mxu0 0
    %825 = vmatmul.mubr.bf16.gmra.mrb[0].mxu0 %v712
    %v826 = vpop.f32.mrb[0].mxu0
    %v827 = vadd.f32 %v734, %v826
    %v828 = vpop.f32.mrb[0].mxu0
    %v829 = vpop.f32.mrb[0].mxu0
    %v830 = vadd.f32 %v734, %v829
    %v831 = vpop.f32.mrb[0].mxu0
    %832 = vdwg.mxu0
    %833 = vst [vmem:[#allocation8] sm:$0xff] %v819
    %834 = vst [vmem:[#allocation8 + $0x8] sm:$0xff] %v822
    %835 = vst [vmem:[#allocation8 + $0x10] sm:$0xff] %v827
    %836 = vst [vmem:[#allocation8 + $0x18] sm:$0xff] %v830
    // Predicated region
    $region34: #{_net_forward_padded.1} parent=1 // pred_check
      _
    $region35: #{_net_forward_padded.1} parent=1 // pred_check_branch
      %838 = sbr.rel (0) target = $region37
    $region36: #{_net_forward_padded.1} parent=1 // pred_region
      %s840 = ssub.s32 512, 512
      %841 = vsyncadd [#allocation4], %s840
      %s842 = sshll.u32 [#allocation8], 4
      %s843 = int_to_ptr.vmem [resolvable:$true] %s842
      %848 = dma.vmem_to_hbm [thread:$0]  %s843, 512, %s5, [#allocation4], 128, 128, 8
    $region37: #{_net_forward_padded.1} parent=1 // pred_fallthru
      _
    // Predicated region
    $region38: #{_net_forward_padded.1} parent=1 // pred_check
      _
    $region39: #{_net_forward_padded.1} parent=1 // pred_check_branch
      %850 = sbr.rel (0) target = $region41
    $region40: #{_net_forward_padded.1} parent=1 // pred_region
      %851 = dma.done [#allocation4], 512
    $region41: #{_net_forward_padded.1} parent=1 // pred_fallthru
      _
    %852 = vsyncpa [#allocation3], 1
    %853 = vsyncpa [#allocation6], 1
    %854 = vsyncpa [#allocation4], 1

</llo_original>
